<compile_context>
chip_gen: v7x
topology: tpu7x:2x2x1
jax: 0.10.0
libtpu: 0.0.40
codegen_flags: <defaults>
</compile_context>

<pallas_src>
import functools

import jax
import jax.numpy as jnp
from jax.experimental import pallas as pl
from jax.experimental.pallas import tpu as pltpu

LANES = 128  # lane width; hidden dim (16) and node dim are padded into it


def gcn_kernel(adj_ref, par_ref, b2_ref, o_ref, *, n_pad):
    a = adj_ref[0:n_pad, :]                 # (n_pad, 128)  A_norm, zero-padded lanes
    at = adj_ref[n_pad:2 * n_pad, :]        # (n_pad, 128)  A_norm^T, zero-padded lanes
    x_row = par_ref[0:1, :]                 # (1, 128)  x^T  (in_features == 1)
    w1 = par_ref[1:2, :]                    # (1, 128)  W1 row (1 -> 16)
    b1 = par_ref[2:3, :]                    # (1, 128)
    w2 = par_ref[3:4, :]                    # (1, 128)  W2^T row (16 -> 1)

    # Layer 1: H1 = relu(A @ (x * w1) + b1) == relu((A @ x) * w1 + b1).
    # A @ x as a lane reduction (x lives in lanes), then the rank-1 outer
    # product with w1 on the VPU.
    ax = jnp.sum(a * x_row, axis=-1, keepdims=True)          # (n_pad, 1)
    h1 = jnp.maximum(ax * w1 + b1, 0.0)                       # (n_pad, 128)

    # Layer 2: out = A @ (H1 @ w2) + b2.  Contract the hidden dim with w2 first
    # (lane reduction), then the A @ (.) matvec as a sublane reduction against
    # A^T, producing a lane-dense (1, 128) output row (node index in lanes).
    h1w2 = jnp.sum(h1 * w2, axis=-1, keepdims=True)           # (n_pad, 1)
    o_row = jnp.sum(at * h1w2, axis=0, keepdims=True) + b2_ref[0, 0]
    o_ref[...] = o_row                                         # (1, 128)


def normalized_adjacency(edge_index, num_nodes):
    """Dense D^-1/2 (A + I) D^-1/2, matching PyG GCNConv's gcn_norm."""
    src, dst = edge_index[0], edge_index[1]
    # One-hot matmul build (scatter lowers poorly on TPU); messages flow
    # src -> dst, i.e. dense A[dst, src] = 1.  Duplicate edges sum, as in
    # gcn_norm with unit edge weights.
    dst_oh = jax.nn.one_hot(dst, num_nodes, dtype=jnp.float32)   # (E, N)
    src_oh = jax.nn.one_hot(src, num_nodes, dtype=jnp.float32)   # (E, N)
    a = dst_oh.T @ src_oh
    a = a + jnp.eye(num_nodes, dtype=jnp.float32)                # self-loops
    deg = a.sum(axis=1)
    d_inv_sqrt = jnp.where(deg > 0, 1.0 / jnp.sqrt(deg), 0.0)
    return d_inv_sqrt[:, None] * a * d_inv_sqrt[None, :]
    # TODO(synk): for non-toy graphs, replace the dense O(N^2) adjacency with a
    # sparse edge-list aggregation kernel (scalar-prefetched indices) and tile
    # the node dim (256 on v6e/v7x, 128 on v5e) with bf16 MXU operands.


@jax.jit
def gcn_forward(x, edge_index, params):
    n = x.shape[0]
    hid = params["w1"].shape[1]
    n_pad = max(8, ((n + 7) // 8) * 8)
    # TODO(synk): graphs with > 128 nodes need a tiled adjacency instead of a
    # single lane-padded 128-wide slab.
    a = normalized_adjacency(edge_index, n)                       # (n, n)

    # Pack A and A^T (lane-padded) into one VMEM operand -> one DMA.
    a_pad = jnp.zeros((n_pad, LANES), jnp.float32).at[:n, :n].set(a)
    at_pad = jnp.zeros((n_pad, LANES), jnp.float32).at[:n, :n].set(a.T)
    adj = jnp.concatenate([a_pad, at_pad], axis=0)                # (2*n_pad, 128)

    # Pack x, w1, b1, w2 as rows of one (8, 128) VMEM operand -> one DMA.
    par = jnp.zeros((8, LANES), jnp.float32)
    par = par.at[0, :n].set(x[:, 0])
    par = par.at[1, :hid].set(params["w1"][0, :])
    par = par.at[2, :hid].set(params["b1"])
    par = par.at[3, :hid].set(params["w2"][:, 0])

    b2 = params["b2"].reshape(1, 1)                               # SMEM scalar

    out_row = pl.pallas_call(
        functools.partial(gcn_kernel, n_pad=n_pad),
        out_shape=jax.ShapeDtypeStruct((1, LANES), jnp.float32),
        in_specs=[
            pl.BlockSpec(memory_space=pltpu.MemorySpace.VMEM),
            pl.BlockSpec(memory_space=pltpu.MemorySpace.VMEM),
            pl.BlockSpec(memory_space=pltpu.MemorySpace.SMEM),
        ],
        out_specs=pl.BlockSpec(memory_space=pltpu.MemorySpace.VMEM),
    )(adj, par, b2)

    return out_row[0, :n][:, None]                                # (n, 1)


def _reference(x, edge_index, params):
    a = normalized_adjacency(edge_index, x.shape[0])
    h1 = jnp.maximum(a @ (x @ params["w1"]) + params["b1"], 0.0)
    return a @ (h1 @ params["w2"]) + params["b2"]


if __name__ == "__main__":
    # Graph from the PyTorch snippet: 3 nodes, 4 directed edges.
    edge_index = jnp.array([[0, 1, 1, 2], [1, 0, 2, 1]], dtype=jnp.int32)
    x = jnp.array([[-1.0], [0.0], [1.0]], dtype=jnp.float32)

    # Deterministic parameter init (glorot-uniform weights, zero bias,
    # matching GCNConv's shapes: 1->16, 16->1).
    key = jax.random.PRNGKey(0)
    k1, k2 = jax.random.split(key)

    def glorot(k, shape):
        fan_in, fan_out = shape
        lim = (6.0 / (fan_in + fan_out)) ** 0.5
        return jax.random.uniform(k, shape, jnp.float32, -lim, lim)

    params = {
        "w1": glorot(k1, (1, 16)),
        "b1": jnp.zeros((16,), jnp.float32),
        "w2": glorot(k2, (16, 1)),
        "b2": jnp.zeros((1,), jnp.float32),
    }

    out = jax.block_until_ready(gcn_forward(x, edge_index, params))

    ref = _reference(x, edge_index, params)
    assert out.shape == (3, 1)
    assert jnp.allclose(out, ref, atol=1e-5, rtol=1e-5)

    print("KERNEL_OK")
</pallas_src>

<mosaic_0001>
module attributes {stable_mosaic.version = 11 : i64} {
  func.func @gcn_kernel(%arg0: memref<16x128xf32, #tpu.memory_space<vmem>>, %arg1: memref<8x128xf32, #tpu.memory_space<vmem>>, %arg2: memref<1x1xf32, #tpu.memory_space<smem>>, %arg3: memref<1x128xf32, #tpu.memory_space<vmem>>) attributes {dimension_semantics = [], scalar_prefetch = 0 : i64, scratch_operands = 0 : i64, tpu.core_type = #tpu.core_type<tc>} {
    %c0 = arith.constant 0 : index
    %c0_0 = arith.constant 0 : index
    %0 = vector.load %arg0[%c0, %c0_0] : memref<16x128xf32, #tpu.memory_space<vmem>>, vector<8x128xf32>
    %c8 = arith.constant 8 : index
    %c0_1 = arith.constant 0 : index
    %1 = vector.load %arg0[%c8, %c0_1] : memref<16x128xf32, #tpu.memory_space<vmem>>, vector<8x128xf32>
    %c0_2 = arith.constant 0 : index
    %c0_3 = arith.constant 0 : index
    %2 = vector.load %arg1[%c0_2, %c0_3] : memref<8x128xf32, #tpu.memory_space<vmem>>, vector<1x128xf32>
    %c1 = arith.constant 1 : index
    %c0_4 = arith.constant 0 : index
    %3 = vector.load %arg1[%c1, %c0_4] : memref<8x128xf32, #tpu.memory_space<vmem>>, vector<1x128xf32>
    %c2 = arith.constant 2 : index
    %c0_5 = arith.constant 0 : index
    %4 = vector.load %arg1[%c2, %c0_5] : memref<8x128xf32, #tpu.memory_space<vmem>>, vector<1x128xf32>
    %c3 = arith.constant 3 : index
    %c0_6 = arith.constant 0 : index
    %5 = vector.load %arg1[%c3, %c0_6] : memref<8x128xf32, #tpu.memory_space<vmem>>, vector<1x128xf32>
    %6 = vector.broadcast %2 : vector<1x128xf32> to vector<8x128xf32>
    %7 = arith.mulf %0, %6 : vector<8x128xf32>
    %cst = arith.constant dense<0.000000e+00> : vector<8xf32>
    %8 = vector.multi_reduction <add>, %7, %cst [1] : vector<8x128xf32> to vector<8xf32>
    %9 = vector.shape_cast %8 : vector<8xf32> to vector<8x1xf32>
    %10 = vector.broadcast %9 : vector<8x1xf32> to vector<8x128xf32>
    %11 = vector.broadcast %3 : vector<1x128xf32> to vector<8x128xf32>
    %12 = arith.mulf %10, %11 : vector<8x128xf32>
    %13 = vector.broadcast %4 : vector<1x128xf32> to vector<8x128xf32>
    %14 = arith.addf %12, %13 : vector<8x128xf32>
    %cst_7 = arith.constant 0.000000e+00 : f32
    %15 = vector.broadcast %cst_7 : f32 to vector<8x128xf32>
    %16 = arith.maximumf %14, %15 : vector<8x128xf32>
    %17 = vector.broadcast %5 : vector<1x128xf32> to vector<8x128xf32>
    %18 = arith.mulf %16, %17 : vector<8x128xf32>
    %cst_8 = arith.constant dense<0.000000e+00> : vector<8xf32>
    %19 = vector.multi_reduction <add>, %18, %cst_8 [1] : vector<8x128xf32> to vector<8xf32>
    %20 = vector.shape_cast %19 : vector<8xf32> to vector<8x1xf32>
    %21 = vector.broadcast %20 : vector<8x1xf32> to vector<8x128xf32>
    %22 = arith.mulf %1, %21 : vector<8x128xf32>
    %cst_9 = arith.constant dense<0.000000e+00> : vector<128xf32>
    %23 = vector.multi_reduction <add>, %22, %cst_9 [0] : vector<8x128xf32> to vector<128xf32>
    %24 = vector.shape_cast %23 : vector<128xf32> to vector<1x128xf32>
    %c0_10 = arith.constant 0 : index
    %c0_11 = arith.constant 0 : index
    %25 = memref.load %arg2[%c0_10, %c0_11] : memref<1x1xf32, #tpu.memory_space<smem>>
    %26 = vector.broadcast %25 : f32 to vector<1x128xf32>
    %27 = arith.addf %24, %26 : vector<1x128xf32>
    %c0_12 = arith.constant 0 : index
    %c0_13 = arith.constant 0 : index
    %28 = vector.load %arg3[%c0_12, %c0_13] : memref<1x128xf32, #tpu.memory_space<vmem>>, vector<1x128xf32>
    tpu.vector_store %arg3[%c0_12, %c0_13], %27 {strides = array<i32>} : memref<1x128xf32, #tpu.memory_space<vmem>>, vector<1x128xf32>,
    return
  }
}

</mosaic_0001>

<llo_original>
// kernel: gcn_forward.1
$region0: #{gcn_forward.1}
  #allocation0 [shape = 'u32[]', space=smem, size = 0x4, offset = 0x4, fixed_abs, tag = 'smem constant byte address 0x4 - core index']
  #allocation1 [shape = 'u32[144,128]{1,0:T(1,128)}', space=vmem, size = 0x12000, scoped, tag = 'internal scratch']
  #allocation2 [shape = 'f32[1,1]{1,0:T(1,128)S(6)}', space=smem, size = 0x200, scoped, tag = 'scoped memory for gcn_forward.1']
  %s0 = inlined_call_operand.vmem [shape: f32[16,128], index: 0, kind: input, shape index: {}]
  %s1 = inlined_call_operand.vmem [shape: f32[8,128], index: 1, kind: input, shape index: {}]
  %s2 = inlined_call_operand.<no memory space> [shape: f32[1,1], index: 2, kind: input, shape index: {}]
  %s3 = inlined_call_operand.vmem [shape: f32[1,128], index: 3, kind: output, shape index: {}]
  %s4 = sld [smem:[#allocation0]]
  $region22: #{gcn_forward.1} parent=0
    _
  %s6 = ssub.s32 1, %s4
  %s7 = scalar_select 0, %s6, %s4
  %8 = sst [smem:[#allocation2]] %s2
  // Predicated region
  $region2: #{gcn_forward.1} parent=0 // pred_check
    _
  $region3: #{gcn_forward.1} parent=0 // pred_check_branch
    %10 = sbr.rel (0) target = $region5
  $region4: #{gcn_forward.1} parent=0 // pred_region
    _
  $region5: #{gcn_forward.1} parent=0 // pred_fallthru
    _
  // Predicated region
  $region6: #{gcn_forward.1} parent=0 // pred_check
    _
  $region7: #{gcn_forward.1} parent=0 // pred_check_branch
    %12 = sbr.rel (0) target = $region9
  $region8: #{gcn_forward.1} parent=0 // pred_region
    _
  $region9: #{gcn_forward.1} parent=0 // pred_fallthru
    _
  // Predicated region
  $region10: #{gcn_forward.1} parent=0 // pred_check
    _
  $region11: #{gcn_forward.1} parent=0 // pred_check_branch
    %14 = sbr.rel (0) target = $region13
  $region12: #{gcn_forward.1} parent=0 // pred_region
    _
  $region13: #{gcn_forward.1} parent=0 // pred_fallthru
    _
  %v15 = vld [vmem:[%s0] sm:$0xff]
  %v16 = vld [vmem:[%s0 + $0x8] sm:$0xff]
  %v17 = vld [vmem:[%s1] sm:$0x1]
  %v18 = vld [vmem:[%s1 + $0x1] sm:$0x1]
  %v19 = vld [vmem:[%s1 + $0x2] sm:$0x1]
  %v20 = vld [vmem:[%s1 + $0x3] sm:$0x1]
  %v21 = vlaneseq
  %v22 = vshrl.u32 %v21, 7
  %v23 = vsub.s32 0, %v22
  %v24 = vrot.slane %v17, %v23
  %v25 = vmul.f32 %v15, %v24
  %26 = vadd.xlane.f32.xlu0 %v25
  %v27 = vpop.xlane.xlu0 %26
  %v28 = vlaneseq
  %v29 = vshrl.u32 %v28, 7
  %v30 = vsub.s32 0, %v29
  %v31 = vrot.slane %v18, %v30
  %v32 = vmul.f32 %v27, %v31
  %v33 = vlaneseq
  %v34 = vshrl.u32 %v33, 7
  %v35 = vsub.s32 0, %v34
  %v36 = vrot.slane %v19, %v35
  %v37 = vadd.f32 %v32, %v36
  %v38 = vmax.f32 %v37, 0.0
  %v39 = vlaneseq
  %v40 = vshrl.u32 %v39, 7
  %v41 = vsub.s32 0, %v40
  %v42 = vrot.slane %v20, %v41
  %v43 = vmul.f32 %v38, %v42
  %44 = vadd.xlane.f32.xlu0 %v43
  %v45 = vpop.xlane.xlu0 %44
  %v46 = vmul.f32 %v16, %v45
  %v47 = vrot.slane %v46, 4
  %v48 = vadd.f32 %v46, %v47
  %v49 = vrot.slane %v48, 2
  %v50 = vadd.f32 %v48, %v49
  %v51 = vrot.slane %v50, 1
  %v52 = vadd.f32 %v50, %v51
  %s53 = sld [smem:[#allocation2]]
  %v54 = vstv %s53
  %v55 = vadd.f32 %v52, %v54
  %56 = vst [vmem:[%s3] sm:$0x1] %v55
  // Predicated region
  $region14: #{gcn_forward.1} parent=0 // pred_check
    _
  $region15: #{gcn_forward.1} parent=0 // pred_check_branch
    %58 = sbr.rel (0) target = $region17
  $region16: #{gcn_forward.1} parent=0 // pred_region
    _
  $region17: #{gcn_forward.1} parent=0 // pred_fallthru
    _
  // Predicated region
  $region18: #{gcn_forward.1} parent=0 // pred_check
    _
  $region19: #{gcn_forward.1} parent=0 // pred_check_branch
    %60 = sbr.rel (0) target = $region21
  $region20: #{gcn_forward.1} parent=0 // pred_region
    _
  $region21: #{gcn_forward.1} parent=0 // pred_fallthru
    _

</llo_original>
